<compile_context>
chip_gen: v7x
topology: tpu7x:2x2x1
jax: 0.10.0
libtpu: 0.0.40
codegen_flags: <defaults>
</compile_context>

<pallas_src>
import functools
import math

import jax
import jax.numpy as jnp
from jax.experimental import pallas as pl
from jax.experimental.pallas import tpu as pltpu


def _round_up(a, b):
    return (a + b - 1) // b * b


def _vq_kernel(x_ref, e_ref, et_ref, esq_ref, q_ref, dist_ref, hist_ref, *,
               num_rows, scores_in_bf16):
    """One (channel, row-tile) grid step.

    x_ref   : (TM, Dp)  f32   input vectors (zero-padded lanes)
    e_ref   : (Cp, Dp)  f32   codebook for this channel (zero-padded)
    et_ref  : (Dp, Cp)  f32   pre-transposed codebook (scores as a plain NN matmul)
    esq_ref : (1,  Cp)  f32   ||e||^2 per codeword (1e30 on padded classes)
    q_ref   : (TM, Dp)  f32   nearest codeword per row
    dist_ref: (TM, 1)   f32   ||x - q||^2 per row
    hist_ref: (8,  Cp)  f32   partial histogram of selected indices (valid rows only)
    """
    tm, _ = x_ref.shape
    cp = et_ref.shape[1]

    x = x_ref[...]                                                   # (TM, Dp)

    # scores = x @ E^T on the MXU (E^T is pre-transposed on host -> NN matmul).
    if scores_in_bf16:
        scores = jnp.dot(x.astype(jnp.bfloat16),
                         et_ref[...].astype(jnp.bfloat16),
                         preferred_element_type=jnp.float32)         # (TM, Cp)
    else:
        scores = jnp.dot(x, et_ref[...],
                         preferred_element_type=jnp.float32)         # (TM, Cp)

    # ||x - e||^2 = ||x||^2 - 2 x.e + ||e||^2 ; drop the per-row-constant ||x||^2.
    d = esq_ref[...] - 2.0 * scores                                  # (TM, Cp)

    # Integer-space argmin (first index attaining the minimum == torch tie-break).
    d_min = jnp.min(d, axis=-1, keepdims=True)                       # (TM, 1)
    lane_i = jax.lax.broadcasted_iota(jnp.int32, d.shape, 1)         # (TM, Cp)
    idx = jnp.min(jnp.where(d <= d_min, lane_i, jnp.int32(cp)),
                  axis=-1, keepdims=True)                            # (TM, 1) int32

    # Zero-padded rows (>= num_rows) are pointed at the nonexistent class Cp so they
    # contribute neither to the gather nor to the histogram.
    row_id = pl.program_id(1) * tm + jax.lax.broadcasted_iota(jnp.int32, (tm, 1), 0)
    idx = jnp.where(row_id < num_rows, idx, jnp.int32(cp))           # (TM, 1)

    # One-hot @ E on the MXU = exact codeword gather; the same one-hot is the histogram.
    onehot = (lane_i == idx).astype(jnp.float32)                     # (TM, Cp)
    q = jnp.dot(onehot, e_ref[...], preferred_element_type=jnp.float32)   # (TM, Dp)
    q_ref[...] = q

    diff = x - q
    dist_ref[...] = jnp.sum(diff * diff, axis=-1, keepdims=True)     # (TM, 1)

    # Lane-dense partial histogram: fold (TM, Cp) -> (8, Cp); wrapper finishes the sum.
    hist_ref[...] = jnp.sum(onehot.reshape(tm // 8, 8, cp), axis=0)  # (8, Cp)


def quantizer_kotha_forward(x0, embedding0, *, normalize_scale=None, tile_m=None,
                            scores_in_bf16=False):
    """x0: (B, T, n_channels, vec_len) f32; embedding0: (n_channels, n_classes, vec_len)."""
    B, T, C, D = x0.shape
    Ce, n_classes, De = embedding0.shape
    assert Ce == C and De == D

    x0 = x0.astype(jnp.float32)
    embedding0 = embedding0.astype(jnp.float32)

    if normalize_scale is not None:
        target_norm = normalize_scale * math.sqrt(D)
        x0_norm = jnp.linalg.norm(x0, axis=3, keepdims=True)          # (B,T,C,1)
        x = target_norm * x0 / x0_norm
        emb = target_norm * embedding0 / jnp.linalg.norm(embedding0, axis=2, keepdims=True)
    else:
        x = x0
        emb = embedding0

    M = B * T
    Dp = _round_up(D, 128)
    Cp = _round_up(n_classes, 128)

    # Row-tile heuristic: big codebooks -> smaller TM so the (TM,Cp) intermediates plus
    # the double-buffered codebook copies fit v7x's 64 MiB VMEM; small codebooks are
    # HBM-bound -> bigger TM amortizes the ~0.35 us per-grid-step overhead (v5e/v6e).
    if tile_m is None:
        if Cp >= 1024:
            tile_m = 256
        elif Cp >= 512:
            tile_m = 512
        else:
            tile_m = 1024
    TM = min(tile_m, _round_up(M, 8))
    assert TM % 8 == 0
    Mp = _round_up(M, TM)
    n_tiles = Mp // TM

    # --- cheap one-time glue: layout + zero-padding (exact for the matmuls) ---
    if C == 1:
        x_c = x.reshape(1, M, D)                                       # no transpose needed
    else:
        x_c = jnp.transpose(x.reshape(M, C, D), (1, 0, 2))             # (C, M, D)
    x_p = jnp.pad(x_c, ((0, 0), (0, Mp - M), (0, Dp - D)))             # (C, Mp, Dp)
    emb_p = jnp.pad(emb, ((0, 0), (0, Cp - n_classes), (0, Dp - D)))   # (C, Cp, Dp)
    emb_t = jnp.transpose(emb_p, (0, 2, 1))                            # (C, Dp, Cp) one-time
    esq = jnp.sum(emb_p * emb_p, axis=-1)                              # (C, Cp)
    valid = (jnp.arange(Cp) < n_classes)[None, :]
    esq = jnp.where(valid, esq, jnp.float32(1e30))[:, None, :]         # (C, 1, Cp)

    grid = (C, n_tiles)

    flops = 4 * M * C * Cp * Dp                  # scores + one-hot-gather matmuls
    bytes_accessed = 4 * (C * Mp * Dp * 2        # x in + q out
                          + C * Cp * Dp * 2      # codebook + pre-transposed copy
                          + C * Cp               # ||e||^2
                          + C * Mp               # dist
                          + C * n_tiles * 8 * Cp)  # histogram partials

    kernel = functools.partial(_vq_kernel, num_rows=M, scores_in_bf16=scores_in_bf16)

    q_p, dist_p, hist_p = pl.pallas_call(
        kernel,
        out_shape=(
            jax.ShapeDtypeStruct((C, Mp, Dp), jnp.float32),
            jax.ShapeDtypeStruct((C, Mp, 1), jnp.float32),
            jax.ShapeDtypeStruct((C, n_tiles * 8, Cp), jnp.float32),
        ),
        grid_spec=pltpu.PrefetchScalarGridSpec(
            num_scalar_prefetch=0,
            grid=grid,
            in_specs=[
                pl.BlockSpec((None, TM, Dp), lambda c, m: (c, m, 0)),   # x tile
                pl.BlockSpec((None, Cp, Dp), lambda c, m: (c, 0, 0)),   # codebook (resident per channel)
                pl.BlockSpec((None, Dp, Cp), lambda c, m: (c, 0, 0)),   # codebook^T (resident per channel)
                pl.BlockSpec((None, 1, Cp), lambda c, m: (c, 0, 0)),    # ||e||^2
            ],
            out_specs=[
                pl.BlockSpec((None, TM, Dp), lambda c, m: (c, m, 0)),   # quantized
                pl.BlockSpec((None, TM, 1), lambda c, m: (c, m, 0)),    # ||x - q||^2
                pl.BlockSpec((None, 8, Cp), lambda c, m: (c, m, 0)),    # histogram partial
            ],
        ),
        compiler_params=pltpu.CompilerParams(
            dimension_semantics=("parallel", "parallel"),
            vmem_limit_bytes=48 * 1024 * 1024),
        cost_estimate=pl.CostEstimate(flops=flops, transcendentals=0,
                                      bytes_accessed=bytes_accessed),
    )(x_p, emb_p, emb_t, esq)

    # --- unpad / back to the module's layout ---
    if C == 1:
        output = q_p[0, :M, :D].reshape(B, T, 1, D)
        out1 = dist_p[0, :M, 0].reshape(B, T, 1)
    else:
        output = jnp.transpose(q_p[:, :M, :D], (1, 0, 2)).reshape(B, T, C, D)
        out1 = jnp.transpose(dist_p[:, :M, 0], (1, 0)).reshape(B, T, C)

    if normalize_scale is not None:
        # ||x - x0||^2 = (target_norm - ||x0||)^2 since x is x0 rescaled to target_norm.
        out2 = out1 + (target_norm - x0_norm[..., 0]) ** 2
    else:
        out2 = out1    # x == x0 -> the extra term is identically zero

    # entropy of the index histogram (torch: histc + masked_select, divided by B*T)
    counts = jnp.sum(hist_p, axis=(0, 1))[:n_classes]                  # (n_classes,)
    prob = counts / jnp.float32(M)
    safe_p = jnp.where(counts > 0, prob, 1.0)
    entropy = -jnp.sum(safe_p * jnp.log(safe_p))

    out0 = output   # straight-through: forward value equals the quantized vectors
    return out0, out1, out2, entropy


def _reference(x0, embedding0, *, normalize_scale=None):
    """Pure-JAX mirror of the PyTorch forward (training-mode forward values)."""
    B, T, C, D = x0.shape
    n_classes = embedding0.shape[1]
    if normalize_scale is not None:
        tn = normalize_scale * math.sqrt(D)
        x = tn * x0 / jnp.linalg.norm(x0, axis=3, keepdims=True)
        emb = tn * embedding0 / jnp.linalg.norm(embedding0, axis=2, keepdims=True)
    else:
        x, emb = x0, embedding0
    x1 = x.reshape(B * T, C, 1, D)
    d = jnp.linalg.norm(x1 - emb[None], axis=3)                 # (BT, C, n_classes)
    index = jnp.argmin(d, axis=2)                               # (BT, C)
    counts = jnp.sum(jax.nn.one_hot(index.reshape(-1), n_classes, dtype=jnp.float32), axis=0)
    prob = counts / jnp.float32(B * T)
    safe_p = jnp.where(counts > 0, prob, 1.0)
    entropy = -jnp.sum(safe_p * jnp.log(safe_p))
    offset = jnp.arange(C) * n_classes
    index1 = (index + offset[None, :]).reshape(-1)
    output = emb.reshape(-1, D)[index1].reshape(B, T, C, D)
    out0 = output
    out1 = jnp.sum((x - output) ** 2, axis=3)
    out2 = out1 + jnp.sum((x - x0) ** 2, axis=3)
    return out0, out1, out2, entropy


if __name__ == "__main__":
    # small shapes consistent with the module: (B, T, n_channels, vec_len)
    B, T, C, D = 2, 8, 1, 64
    n_classes = 16

    key = jax.random.PRNGKey(0)
    kx, ke = jax.random.split(key)
    x0 = jax.random.normal(kx, (B, T, C, D), dtype=jnp.float32)
    embedding0 = jax.random.normal(ke, (C, n_classes, D), dtype=jnp.float32) * 0.3

    # default (no normalization) path
    out0, out1, out2, entropy = quantizer_kotha_forward(x0, embedding0)
    out0 = jax.block_until_ready(out0)

    r0, r1, r2, rent = _reference(x0, embedding0)
    assert out0.shape == (B, T, C, D)
    assert out1.shape == (B, T, C) and out2.shape == (B, T, C)
    assert jnp.allclose(out0, r0, rtol=1e-4, atol=1e-5), "out0 mismatch vs reference"
    assert jnp.allclose(out1, r1, rtol=1e-4, atol=1e-5), "out1 mismatch vs reference"
    assert jnp.allclose(out2, r2, rtol=1e-4, atol=1e-5), "out2 mismatch vs reference"
    assert abs(float(entropy) - float(rent)) < 1e-5, "entropy mismatch vs reference"

    # normalized path (exercises the closed-form (x - x0)^2 term)
    n0, n1, n2, nent = quantizer_kotha_forward(x0, embedding0, normalize_scale=0.06)
    n0 = jax.block_until_ready(n0)
    s0, s1, s2, sent = _reference(x0, embedding0, normalize_scale=0.06)
    assert jnp.allclose(n0, s0, rtol=1e-4, atol=1e-5), "normalized out0 mismatch"
    assert jnp.allclose(n1, s1, rtol=1e-4, atol=1e-5), "normalized out1 mismatch"
    assert jnp.allclose(n2, s2, rtol=1e-4, atol=1e-5), "normalized out2 mismatch"
    assert abs(float(nent) - float(sent)) < 1e-5, "normalized entropy mismatch"

    print("KERNEL_OK")
</pallas_src>

<mosaic_0001>
module attributes {stable_mosaic.version = 11 : i64} {
  func.func @_vq_kernel(%arg0: i32, %arg1: i32, %arg2: memref<1x16x128xf32, #tpu.memory_space<vmem>>, %arg3: memref<1x128x128xf32, #tpu.memory_space<vmem>>, %arg4: memref<1x128x128xf32, #tpu.memory_space<vmem>>, %arg5: memref<1x1x128xf32, #tpu.memory_space<vmem>>, %arg6: memref<1x16x128xf32, #tpu.memory_space<vmem>>, %arg7: memref<1x16x1xf32, #tpu.memory_space<vmem>>, %arg8: memref<1x8x128xf32, #tpu.memory_space<vmem>>) attributes {dimension_semantics = [#tpu.dimension_semantics<parallel>, #tpu.dimension_semantics<parallel>], iteration_bounds = array<i64: 1, 1>, scalar_prefetch = 0 : i64, scratch_operands = 0 : i64, tpu.core_type = #tpu.core_type<tc>, window_params = [{transform_indices = @transform_0, window_bounds = array<i64: 1, 16, 128>}, {transform_indices = @transform_1, window_bounds = array<i64: 1, 128, 128>}, {transform_indices = @transform_2, window_bounds = array<i64: 1, 128, 128>}, {transform_indices = @transform_3, window_bounds = array<i64: 1, 1, 128>}, {transform_indices = @transform_4, window_bounds = array<i64: 1, 16, 128>}, {transform_indices = @transform_5, window_bounds = array<i64: 1, 16, 1>}, {transform_indices = @transform_6, window_bounds = array<i64: 1, 8, 128>}]} {
    %c0 = arith.constant 0 : index
    %c0_0 = arith.constant 0 : index
    %c0_1 = arith.constant 0 : index
    %0 = vector.load %arg2[%c0, %c0_0, %c0_1] : memref<1x16x128xf32, #tpu.memory_space<vmem>>, vector<1x16x128xf32>
    %1 = vector.shape_cast %0 : vector<1x16x128xf32> to vector<16x128xf32>
    %c0_2 = arith.constant 0 : index
    %c0_3 = arith.constant 0 : index
    %c0_4 = arith.constant 0 : index
    %2 = vector.load %arg4[%c0_2, %c0_3, %c0_4] : memref<1x128x128xf32, #tpu.memory_space<vmem>>, vector<1x128x128xf32>
    %3 = vector.shape_cast %2 : vector<1x128x128xf32> to vector<128x128xf32>
    %cst = arith.constant dense<0.000000e+00> : vector<16x128xf32>
    %4 = tpu.matmul %1, %3, %cst {dimension_numbers = #tpu.dot_dimension_numbers<[1], [0], [0], [1], [0, 0, 1, 1], [], []>} : vector<16x128xf32>, vector<128x128xf32>, vector<16x128xf32> -> vector<16x128xf32>
    %c0_5 = arith.constant 0 : index
    %c0_6 = arith.constant 0 : index
    %c0_7 = arith.constant 0 : index
    %5 = vector.load %arg5[%c0_5, %c0_6, %c0_7] : memref<1x1x128xf32, #tpu.memory_space<vmem>>, vector<1x1x128xf32>
    %6 = vector.shape_cast %5 : vector<1x1x128xf32> to vector<1x128xf32>
    %cst_8 = arith.constant 2.000000e+00 : f32
    %7 = vector.broadcast %cst_8 : f32 to vector<16x128xf32>
    %8 = arith.mulf %7, %4 : vector<16x128xf32>
    %9 = vector.broadcast %6 : vector<1x128xf32> to vector<16x128xf32>
    %10 = arith.subf %9, %8 : vector<16x128xf32>
    %cst_9 = arith.constant dense<0x7F800000> : vector<16xf32>
    %11 = vector.multi_reduction <minimumf>, %10, %cst_9 [1] : vector<16x128xf32> to vector<16xf32>
    %12 = vector.shape_cast %11 : vector<16xf32> to vector<16x1xf32>
    %13 = tpu.iota {dimensions = array<i32: 1>} : vector<16x128xi32>
    %14 = vector.broadcast %12 : vector<16x1xf32> to vector<16x128xf32>
    %15 = arith.cmpf ole, %10, %14 : vector<16x128xf32>
    %c128_i32 = arith.constant 128 : i32
    %16 = vector.broadcast %c128_i32 : i32 to vector<16x128xi32>
    %17 = arith.select %15, %13, %16 : vector<16x128xi1>, vector<16x128xi32>
    %cst_10 = arith.constant dense<2147483647> : vector<16xi32>
    %18 = vector.multi_reduction <minsi>, %17, %cst_10 [1] : vector<16x128xi32> to vector<16xi32>
    %19 = vector.shape_cast %18 : vector<16xi32> to vector<16x1xi32>
    %c16_i32 = arith.constant 16 : i32
    %20 = arith.muli %arg1, %c16_i32 : i32
    %21 = tpu.iota {dimensions = array<i32: 0>} : vector<16x1xi32>
    %22 = vector.broadcast %20 : i32 to vector<16x1xi32>
    %23 = arith.addi %22, %21 : vector<16x1xi32>
    %c16_i32_11 = arith.constant 16 : i32
    %24 = vector.broadcast %c16_i32_11 : i32 to vector<16x1xi32>
    %25 = arith.cmpi slt, %23, %24 : vector<16x1xi32>
    %c128_i32_12 = arith.constant 128 : i32
    %26 = vector.broadcast %c128_i32_12 : i32 to vector<16x1xi32>
    %27 = arith.select %25, %19, %26 : vector<16x1xi1>, vector<16x1xi32>
    %28 = vector.broadcast %27 : vector<16x1xi32> to vector<16x128xi32>
    %29 = arith.cmpi eq, %13, %28 : vector<16x128xi32>
    %30 = arith.extui %29 : vector<16x128xi1> to vector<16x128xi32>
    %31 = arith.sitofp %30 : vector<16x128xi32> to vector<16x128xf32>
    %c0_13 = arith.constant 0 : index
    %c0_14 = arith.constant 0 : index
    %c0_15 = arith.constant 0 : index
    %32 = vector.load %arg3[%c0_13, %c0_14, %c0_15] : memref<1x128x128xf32, #tpu.memory_space<vmem>>, vector<1x128x128xf32>
    %33 = vector.shape_cast %32 : vector<1x128x128xf32> to vector<128x128xf32>
    %cst_16 = arith.constant dense<0.000000e+00> : vector<16x128xf32>
    %34 = tpu.matmul %31, %33, %cst_16 {dimension_numbers = #tpu.dot_dimension_numbers<[1], [0], [0], [1], [0, 0, 1, 1], [], []>} : vector<16x128xf32>, vector<128x128xf32>, vector<16x128xf32> -> vector<16x128xf32>
    %c0_17 = arith.constant 0 : index
    %c0_18 = arith.constant 0 : index
    %c0_19 = arith.constant 0 : index
    %35 = vector.load %arg6[%c0_17, %c0_18, %c0_19] : memref<1x16x128xf32, #tpu.memory_space<vmem>>, vector<1x16x128xf32>
    %36 = vector.shape_cast %35 : vector<1x16x128xf32> to vector<16x128xf32>
    %37 = vector.shape_cast %34 : vector<16x128xf32> to vector<1x16x128xf32>
    tpu.vector_store %arg6[%c0_17, %c0_18, %c0_19], %37 {strides = array<i32>} : memref<1x16x128xf32, #tpu.memory_space<vmem>>, vector<1x16x128xf32>,
    %38 = arith.subf %1, %34 : vector<16x128xf32>
    %39 = arith.mulf %38, %38 : vector<16x128xf32>
    %cst_20 = arith.constant dense<0.000000e+00> : vector<16xf32>
    %40 = vector.multi_reduction <add>, %39, %cst_20 [1] : vector<16x128xf32> to vector<16xf32>
    %41 = vector.shape_cast %40 : vector<16xf32> to vector<16x1xf32>
    %c0_21 = arith.constant 0 : index
    %c0_22 = arith.constant 0 : index
    %c0_23 = arith.constant 0 : index
    %42 = vector.load %arg7[%c0_21, %c0_22, %c0_23] : memref<1x16x1xf32, #tpu.memory_space<vmem>>, vector<1x16x1xf32>
    %43 = vector.shape_cast %42 : vector<1x16x1xf32> to vector<16x1xf32>
    %44 = vector.shape_cast %41 : vector<16x1xf32> to vector<1x16x1xf32>
    tpu.vector_store %arg7[%c0_21, %c0_22, %c0_23], %44 {strides = array<i32>} : memref<1x16x1xf32, #tpu.memory_space<vmem>>, vector<1x16x1xf32>,
    %45 = vector.shape_cast %31 : vector<16x128xf32> to vector<2x8x128xf32>
    %cst_24 = arith.constant dense<0.000000e+00> : vector<8x128xf32>
    %46 = vector.multi_reduction <add>, %45, %cst_24 [0] : vector<2x8x128xf32> to vector<8x128xf32>
    %c0_25 = arith.constant 0 : index
    %c0_26 = arith.constant 0 : index
    %c0_27 = arith.constant 0 : index
    %47 = vector.load %arg8[%c0_25, %c0_26, %c0_27] : memref<1x8x128xf32, #tpu.memory_space<vmem>>, vector<1x8x128xf32>
    %48 = vector.shape_cast %47 : vector<1x8x128xf32> to vector<8x128xf32>
    %49 = vector.shape_cast %46 : vector<8x128xf32> to vector<1x8x128xf32>
    tpu.vector_store %arg8[%c0_25, %c0_26, %c0_27], %49 {strides = array<i32>} : memref<1x8x128xf32, #tpu.memory_space<vmem>>, vector<1x8x128xf32>,
    return
  }
  func.func @transform_0(%arg0: i32, %arg1: i32) -> (i32, i32, i32) {
    %c0_i32 = arith.constant 0 : i32
    %c0_i32_0 = arith.constant 0 : i32
    return %arg0, %arg1, %c0_i32 : i32, i32, i32
  }
  func.func @transform_1(%arg0: i32, %arg1: i32) -> (i32, i32, i32) {
    %c0_i32 = arith.constant 0 : i32
    %c0_i32_0 = arith.constant 0 : i32
    %c0_i32_1 = arith.constant 0 : i32
    return %arg0, %c0_i32, %c0_i32_0 : i32, i32, i32
  }
  func.func @transform_2(%arg0: i32, %arg1: i32) -> (i32, i32, i32) {
    %c0_i32 = arith.constant 0 : i32
    %c0_i32_0 = arith.constant 0 : i32
    %c0_i32_1 = arith.constant 0 : i32
    return %arg0, %c0_i32, %c0_i32_0 : i32, i32, i32
  }
  func.func @transform_3(%arg0: i32, %arg1: i32) -> (i32, i32, i32) {
    %c0_i32 = arith.constant 0 : i32
    %c0_i32_0 = arith.constant 0 : i32
    %c0_i32_1 = arith.constant 0 : i32
    return %arg0, %c0_i32, %c0_i32_0 : i32, i32, i32
  }
  func.func @transform_4(%arg0: i32, %arg1: i32) -> (i32, i32, i32) {
    %c0_i32 = arith.constant 0 : i32
    %c0_i32_0 = arith.constant 0 : i32
    return %arg0, %arg1, %c0_i32 : i32, i32, i32
  }
  func.func @transform_5(%arg0: i32, %arg1: i32) -> (i32, i32, i32) {
    %c0_i32 = arith.constant 0 : i32
    %c0_i32_0 = arith.constant 0 : i32
    return %arg0, %arg1, %c0_i32 : i32, i32, i32
  }
  func.func @transform_6(%arg0: i32, %arg1: i32) -> (i32, i32, i32) {
    %c0_i32 = arith.constant 0 : i32
    %c0_i32_0 = arith.constant 0 : i32
    return %arg0, %arg1, %c0_i32 : i32, i32, i32
  }
}

</mosaic_0001>

<llo_original>
// kernel: tpu_custom_call.1
$region0: #{tpu_custom_call.1}
  #allocation0 [shape = 'u32[]', space=smem, size = 0x4, offset = 0x4, fixed_abs, tag = 'smem constant byte address 0x4 - core index']
  #allocation1 [shape = 'u32[144,128]{1,0:T(1,128)}', space=vmem, size = 0x12000, scoped, tag = 'internal scratch']
  %s0 = inlined_call_operand.hbm [shape: f32[1,16,128], index: 0, kind: input, shape index: {}]
  %s1 = inlined_call_operand.hbm [shape: f32[1,128,128], index: 1, kind: input, shape index: {}]
  %s2 = inlined_call_operand.hbm [shape: f32[1,128,128], index: 2, kind: input, shape index: {}]
  %s3 = inlined_call_operand.vmem [shape: f32[1,1,128], index: 3, kind: input, shape index: {}]
  %s4 = inlined_call_operand.hbm [shape: f32[1,16,128], index: 4, kind: output, shape index: {0}]
  %s5 = inlined_call_operand.vmem [shape: f32[1,16,1], index: 5, kind: output, shape index: {1}]
  %s6 = inlined_call_operand.hbm [shape: f32[1,8,128], index: 6, kind: output, shape index: {2}]
  %7 = xla_tuple %s4, %s5, %s6
  %s8 = sld [smem:[#allocation0]]
  $region54: #{tpu_custom_call.1} parent=0
    _
  %s10 = ssub.s32 1, %s8
  %s11 = scalar_select 0, %s10, %s8
  $region1: #{tpu_custom_call.1} parent=0
    #allocation2 [shape = 'u8[8192]{0}', space=vmem, size = 0x2000, scoped, tag = 'input window, operand 0, single buffered']
    #allocation3 [shape = 's32[1]{0}', space=sflag, size = 0x4, scoped, tag = 'scoped memory for tpu_custom_call.1']
    #allocation4 [shape = 's32[1]{0}', space=sflag, size = 0x4, scoped, tag = 'scoped memory for tpu_custom_call.1']
    #allocation5 [shape = 'u8[65536]{0}', space=vmem, size = 0x10000, scoped, tag = 'input window, operand 1, single buffered']
    #allocation6 [shape = 's32[1]{0}', space=sflag, size = 0x4, scoped, tag = 'scoped memory for tpu_custom_call.1']
    #allocation7 [shape = 'u8[65536]{0}', space=vmem, size = 0x10000, scoped, tag = 'input window, operand 2, single buffered']
    #allocation8 [shape = 'u8[8192]{0}', space=vmem, size = 0x2000, scoped, tag = 'output window, operand 0, single buffered']
    #allocation9 [shape = 'u8[4096]{0}', space=vmem, size = 0x1000, scoped, tag = 'output window, operand 2, single buffered']
    #allocation10 [shape = 's32[1]{0}', space=sflag, size = 0x4, scoped, tag = 'scoped memory for tpu_custom_call.1']
    %12 = vsyncpa [#allocation3], 0
    %13 = vsyncpa [#allocation6], 0
    %14 = vsyncpa [#allocation4], 0
    %15 = vsyncpa [#allocation10], 0
    // Predicated region
    $region2: #{tpu_custom_call.1} parent=1 // pred_check
      _
    $region3: #{tpu_custom_call.1} parent=1 // pred_check_branch
      %17 = sbr.rel (0) target = $region5
    $region4: #{tpu_custom_call.1} parent=1 // pred_region
      %s19 = ssub.s32 256, 256
      %20 = vsyncadd [#allocation3], %s19
      %s21 = sshll.u32 [#allocation2], 4
      %s22 = int_to_ptr.vmem [resolvable:$true] %s21
      %27 = dma.hbm_to_vmem [thread:$0]  %s0, 256, %s22, [#allocation3], 128, 128, 8
    $region5: #{tpu_custom_call.1} parent=1 // pred_fallthru
      _
    // Predicated region
    $region6: #{tpu_custom_call.1} parent=1 // pred_check
      _
    $region7: #{tpu_custom_call.1} parent=1 // pred_check_branch
      %29 = sbr.rel (0) target = $region9
    $region8: #{tpu_custom_call.1} parent=1 // pred_region
      %s31 = ssub.s32 2048, 2048
      %32 = vsyncadd [#allocation6], %s31
      %s33 = sshll.u32 [#allocation5], 4
      %s34 = int_to_ptr.vmem [resolvable:$true] %s33
      %39 = dma.hbm_to_vmem [thread:$0]  %s1, 2048, %s34, [#allocation6], 128, 128, 8
    $region9: #{tpu_custom_call.1} parent=1 // pred_fallthru
      _
    // Predicated region
    $region10: #{tpu_custom_call.1} parent=1 // pred_check
      _
    $region11: #{tpu_custom_call.1} parent=1 // pred_check_branch
      %41 = sbr.rel (0) target = $region13
    $region12: #{tpu_custom_call.1} parent=1 // pred_region
      %s43 = ssub.s32 2048, 2048
      %44 = vsyncadd [#allocation6], %s43
      %s45 = sshll.u32 [#allocation7], 4
      %s46 = int_to_ptr.vmem [resolvable:$true] %s45
      %51 = dma.hbm_to_vmem [thread:$0]  %s2, 2048, %s46, [#allocation6], 128, 128, 8
    $region13: #{tpu_custom_call.1} parent=1 // pred_fallthru
      _
    // Predicated region
    $region14: #{tpu_custom_call.1} parent=1 // pred_check
      _
    $region15: #{tpu_custom_call.1} parent=1 // pred_check_branch
      %53 = sbr.rel (0) target = $region17
    $region16: #{tpu_custom_call.1} parent=1 // pred_region
      _
    $region17: #{tpu_custom_call.1} parent=1 // pred_fallthru
      _
    // Predicated region
    $region18: #{tpu_custom_call.1} parent=1 // pred_check
      _
    $region19: #{tpu_custom_call.1} parent=1 // pred_check_branch
      %55 = sbr.rel (0) target = $region21
    $region20: #{tpu_custom_call.1} parent=1 // pred_region
      %56 = dma.done [#allocation3], 256
    $region21: #{tpu_custom_call.1} parent=1 // pred_fallthru
      _
    // Predicated region
    $region22: #{tpu_custom_call.1} parent=1 // pred_check
      _
    $region23: #{tpu_custom_call.1} parent=1 // pred_check_branch
      %58 = sbr.rel (0) target = $region25
    $region24: #{tpu_custom_call.1} parent=1 // pred_region
      %59 = dma.done [#allocation6], 2048
    $region25: #{tpu_custom_call.1} parent=1 // pred_fallthru
      _
    // Predicated region
    $region26: #{tpu_custom_call.1} parent=1 // pred_check
      _
    $region27: #{tpu_custom_call.1} parent=1 // pred_check_branch
      %61 = sbr.rel (0) target = $region29
    $region28: #{tpu_custom_call.1} parent=1 // pred_region
      %62 = dma.done [#allocation6], 2048
    $region29: #{tpu_custom_call.1} parent=1 // pred_fallthru
      _
    %v63 = vld [vmem:[#allocation2] sm:$0xff]
    %v64 = vld [vmem:[#allocation2 + $0x8] sm:$0xff]
    %v65 = vld [vmem:[#allocation7] sm:$0xff]
    %v66 = vld [vmem:[#allocation7 + $0x8] sm:$0xff]
    %v67 = vld [vmem:[#allocation7 + $0x10] sm:$0xff]
    %v68 = vld [vmem:[#allocation7 + $0x18] sm:$0xff]
    %v69 = vld [vmem:[#allocation7 + $0x20] sm:$0xff]
    %v70 = vld [vmem:[#allocation7 + $0x28] sm:$0xff]
    %v71 = vld [vmem:[#allocation7 + $0x30] sm:$0xff]
    %v72 = vld [vmem:[#allocation7 + $0x38] sm:$0xff]
    %v73 = vld [vmem:[#allocation7 + $0x40] sm:$0xff]
    %v74 = vld [vmem:[#allocation7 + $0x48] sm:$0xff]
    %v75 = vld [vmem:[#allocation7 + $0x50] sm:$0xff]
    %v76 = vld [vmem:[#allocation7 + $0x58] sm:$0xff]
    %v77 = vld [vmem:[#allocation7 + $0x60] sm:$0xff]
    %v78 = vld [vmem:[#allocation7 + $0x68] sm:$0xff]
    %v79 = vld [vmem:[#allocation7 + $0x70] sm:$0xff]
    %v80 = vld [vmem:[#allocation7 + $0x78] sm:$0xff]
    %81 = vmatprep.subr.mxu0 0.0
    %82 = vmatpush1.msra.mxu0 %v65
    %83 = vmatprep.subr.mxu0 0.0
    %84 = vmatpush1.msra.mxu0 %v66
    %85 = vmatprep.subr.mxu0 0.0
    %86 = vmatpush1.msra.mxu0 %v67
    %87 = vmatprep.subr.mxu0 0.0
    %88 = vmatpush1.msra.mxu0 %v68
    %89 = vmatprep.subr.mxu0 0.0
    %90 = vmatpush1.msra.mxu0 %v69
    %91 = vmatprep.subr.mxu0 0.0
    %92 = vmatpush1.msra.mxu0 %v70
    %93 = vmatprep.subr.mxu0 0.0
    %94 = vmatpush1.msra.mxu0 %v71
    %95 = vmatprep.subr.mxu0 0.0
    %96 = vmatpush1.msra.mxu0 %v72
    %97 = vmatprep.subr.mxu0 0.0
    %98 = vmatpush1.msra.mxu0 %v73
    %99 = vmatprep.subr.mxu0 0.0
    %100 = vmatpush1.msra.mxu0 %v74
    %101 = vmatprep.subr.mxu0 0.0
    %102 = vmatpush1.msra.mxu0 %v75
    %103 = vmatprep.subr.mxu0 0.0
    %104 = vmatpush1.msra.mxu0 %v76
    %105 = vmatprep.subr.mxu0 0.0
    %106 = vmatpush1.msra.mxu0 %v77
    %107 = vmatprep.subr.mxu0 0.0
    %108 = vmatpush1.msra.mxu0 %v78
    %109 = vmatprep.subr.mxu0 0.0
    %110 = vmatpush1.msra.mxu0 %v79
    %111 = vmatprep.subr.mxu0 0.0
    %112 = vmatpush1.msra.mxu0 %v80
    %113 = vmatprep.subr.mxu0 0.0
    %114 = vmatpush1.msra.mxu0 0.0
    %115 = vmatprep.subr.mxu0 0.0
    %116 = vmatpush1.msra.mxu0 0.0
    %117 = vmatprep.subr.mxu0 0.0
    %118 = vmatpush1.msra.mxu0 0.0
    %119 = vmatprep.subr.mxu0 0.0
    %120 = vmatpush1.msra.mxu0 0.0
    %121 = vmatprep.subr.mxu0 0.0
    %122 = vmatpush1.msra.mxu0 0.0
    %123 = vmatprep.subr.mxu0 0.0
    %124 = vmatpush1.msra.mxu0 0.0
    %125 = vmatprep.subr.mxu0 0.0
    %126 = vmatpush1.msra.mxu0 0.0
    %127 = vmatprep.subr.mxu0 0.0
    %128 = vmatpush1.msra.mxu0 0.0
    %129 = vmatprep.subr.mxu0 0.0
    %130 = vmatpush1.msra.mxu0 0.0
    %131 = vmatprep.subr.mxu0 0.0
    %132 = vmatpush1.msra.mxu0 0.0
    %133 = vmatprep.subr.mxu0 0.0
    %134 = vmatpush1.msra.mxu0 0.0
    %135 = vmatprep.subr.mxu0 0.0
    %136 = vmatpush1.msra.mxu0 0.0
    %137 = vmatprep.subr.mxu0 0.0
    %138 = vmatpush1.msra.mxu0 0.0
    %139 = vmatprep.subr.mxu0 0.0
    %140 = vmatpush1.msra.mxu0 0.0
    %141 = vmatprep.subr.mxu0 0.0
    %142 = vmatpush1.msra.mxu0 0.0
    %143 = vmatprep.subr.mxu0 0.0
    %144 = vmatpush1.msra.mxu0 0.0
    %145 = vmatprep.mubr.f32.mxu0 0.0
    %146 = vmatmul.mubr.f32.gmra.mrb[0].mxu0 %v63
    %v147 = vpop.f32.mrb[0].mxu0
    %v148 = vadd.f32 0.0, %v147
    %v149 = vpop.f32.mrb[0].mxu0
    %150 = vmatprep.mubr.f32.mxu0 0.0
    %151 = vmatmul.mubr.f32.gmra.mrb[0].mxu0 %v64
    %v152 = vpop.f32.mrb[0].mxu0
    %v153 = vadd.f32 0.0, %v152
    %v154 = vpop.f32.mrb[0].mxu0
    %155 = vdwg.mxu0
    %v156 = vld [vmem:[%s3] sm:$0x1]
    %v157 = vmul.f32 %v148, 2.0
    %v158 = vmul.f32 %v153, 2.0
    %v160 = vlaneseq
    %v161 = vshrl.u32 %v160, 7
    %v162 = vsub.s32 0, %v161
    %v163 = vrot.slane %v156, %v162
    %v165 = vsub.f32 %v163, %v157
    %v166 = vsub.f32 %v163, %v158
    %167 = vmin.xlane.f32.xlu0 %v165
    %v168 = vpop.xlane.xlu0 %167
    %169 = vmin.xlane.f32.xlu0 %v166
    %v170 = vpop.xlane.xlu0 %169
    %v171 = vlaneseq
    %v172 = vand.u32 %v171, 127
    %vm173 = vcmp.le.f32.partialorder %v165, %v168
    %vm174 = vcmp.le.f32.partialorder %v166, %v170
    %v175 = vsel %vm173, %v172, 128
    %v176 = vsel %vm174, %v172, 128
    %v177 = vand.u32 %v175, 65535
    %v178 = vshra.s32 %v175, 16
    %v179 = vcvt.s32.f32 %v177
    %v180 = vcvt.s32.f32 %v178
    %181 = vmin.xlane.f32.xlu0 %v180
    %v182 = vpop.xlane.xlu0 %181
    %vm183 = vcmp.eq.f32.partialorder %v180, %v182
    %v184 = vsel %vm183, %v179, inf
    %185 = vmin.xlane.f32.xlu0 %v184
    %v186 = vpop.xlane.xlu0 %185
    %v187 = vcvt.f32.s32 %v186
    %v188 = vcvt.f32.s32 %v182
    %v189 = vshll.u32 %v188, 16
    %v190 = vadd.s32 %v189, %v187
    %v191 = vand.u32 %v176, 65535
    %v192 = vshra.s32 %v176, 16
    %v193 = vcvt.s32.f32 %v191
    %v194 = vcvt.s32.f32 %v192
    %195 = vmin.xlane.f32.xlu0 %v194
    %v196 = vpop.xlane.xlu0 %195
    %vm197 = vcmp.eq.f32.partialorder %v194, %v196
    %v198 = vsel %vm197, %v193, inf
    %199 = vmin.xlane.f32.xlu0 %v198
    %v200 = vpop.xlane.xlu0 %199
    %v201 = vcvt.f32.s32 %v200
    %v202 = vcvt.f32.s32 %v196
    %v203 = vshll.u32 %v202, 16
    %v204 = vadd.s32 %v203, %v201
    %s205 = smul.u32 0, 16
    %v206 = vlaneseq
    %v207 = vshrl.u32 %v206, 7
    %v208 = vadd.s32 %v207, 8
    %v209 = vstv %s205
    %v210 = vadd.s32 %v209, %v207
    %v211 = vadd.s32 %v209, %v208
    %vm212 = vcmp.lt.s32.totalorder %v210, 16
    %vm213 = vcmp.lt.s32.totalorder %v211, 16
    %v214 = vsel %vm212, %v190, 128
    %v215 = vsel %vm213, %v204, 128
    %vm216 = vcmp.eq.s32.totalorder %v172, %v214
    %vm217 = vcmp.eq.s32.totalorder %v172, %v215
    %v218 = vsel %vm216, 1, 0
    %v219 = vsel %vm217, 1, 0
    %v220 = vcvt.s32.f32 %v218
    %v221 = vcvt.s32.f32 %v219
    %v222 = vld [vmem:[#allocation5] sm:$0xff]
    %v223 = vld [vmem:[#allocation5 + $0x8] sm:$0xff]
    %v224 = vld [vmem:[#allocation5 + $0x10] sm:$0xff]
    %v225 = vld [vmem:[#allocation5 + $0x18] sm:$0xff]
    %v226 = vld [vmem:[#allocation5 + $0x20] sm:$0xff]
    %v227 = vld [vmem:[#allocation5 + $0x28] sm:$0xff]
    %v228 = vld [vmem:[#allocation5 + $0x30] sm:$0xff]
    %v229 = vld [vmem:[#allocation5 + $0x38] sm:$0xff]
    %v230 = vld [vmem:[#allocation5 + $0x40] sm:$0xff]
    %v231 = vld [vmem:[#allocation5 + $0x48] sm:$0xff]
    %v232 = vld [vmem:[#allocation5 + $0x50] sm:$0xff]
    %v233 = vld [vmem:[#allocation5 + $0x58] sm:$0xff]
    %v234 = vld [vmem:[#allocation5 + $0x60] sm:$0xff]
    %v235 = vld [vmem:[#allocation5 + $0x68] sm:$0xff]
    %v236 = vld [vmem:[#allocation5 + $0x70] sm:$0xff]
    %v237 = vld [vmem:[#allocation5 + $0x78] sm:$0xff]
    %238 = vmatprep.subr.mxu0 0.0
    %239 = vmatpush1.msra.mxu0 %v222
    %240 = vmatprep.subr.mxu0 0.0
    %241 = vmatpush1.msra.mxu0 %v223
    %242 = vmatprep.subr.mxu0 0.0
    %243 = vmatpush1.msra.mxu0 %v224
    %244 = vmatprep.subr.mxu0 0.0
    %245 = vmatpush1.msra.mxu0 %v225
    %246 = vmatprep.subr.mxu0 0.0
    %247 = vmatpush1.msra.mxu0 %v226
    %248 = vmatprep.subr.mxu0 0.0
    %249 = vmatpush1.msra.mxu0 %v227
    %250 = vmatprep.subr.mxu0 0.0
    %251 = vmatpush1.msra.mxu0 %v228
    %252 = vmatprep.subr.mxu0 0.0
    %253 = vmatpush1.msra.mxu0 %v229
    %254 = vmatprep.subr.mxu0 0.0
    %255 = vmatpush1.msra.mxu0 %v230
    %256 = vmatprep.subr.mxu0 0.0
    %257 = vmatpush1.msra.mxu0 %v231
    %258 = vmatprep.subr.mxu0 0.0
    %259 = vmatpush1.msra.mxu0 %v232
    %260 = vmatprep.subr.mxu0 0.0
    %261 = vmatpush1.msra.mxu0 %v233
    %262 = vmatprep.subr.mxu0 0.0
    %263 = vmatpush1.msra.mxu0 %v234
    %264 = vmatprep.subr.mxu0 0.0
    %265 = vmatpush1.msra.mxu0 %v235
    %266 = vmatprep.subr.mxu0 0.0
    %267 = vmatpush1.msra.mxu0 %v236
    %268 = vmatprep.subr.mxu0 0.0
    %269 = vmatpush1.msra.mxu0 %v237
    %270 = vmatprep.subr.mxu0 0.0
    %271 = vmatpush1.msra.mxu0 0.0
    %272 = vmatprep.subr.mxu0 0.0
    %273 = vmatpush1.msra.mxu0 0.0
    %274 = vmatprep.subr.mxu0 0.0
    %275 = vmatpush1.msra.mxu0 0.0
    %276 = vmatprep.subr.mxu0 0.0
    %277 = vmatpush1.msra.mxu0 0.0
    %278 = vmatprep.subr.mxu0 0.0
    %279 = vmatpush1.msra.mxu0 0.0
    %280 = vmatprep.subr.mxu0 0.0
    %281 = vmatpush1.msra.mxu0 0.0
    %282 = vmatprep.subr.mxu0 0.0
    %283 = vmatpush1.msra.mxu0 0.0
    %284 = vmatprep.subr.mxu0 0.0
    %285 = vmatpush1.msra.mxu0 0.0
    %286 = vmatprep.subr.mxu0 0.0
    %287 = vmatpush1.msra.mxu0 0.0
    %288 = vmatprep.subr.mxu0 0.0
    %289 = vmatpush1.msra.mxu0 0.0
    %290 = vmatprep.subr.mxu0 0.0
    %291 = vmatpush1.msra.mxu0 0.0
    %292 = vmatprep.subr.mxu0 0.0
    %293 = vmatpush1.msra.mxu0 0.0
    %294 = vmatprep.subr.mxu0 0.0
    %295 = vmatpush1.msra.mxu0 0.0
    %296 = vmatprep.subr.mxu0 0.0
    %297 = vmatpush1.msra.mxu0 0.0
    %298 = vmatprep.subr.mxu0 0.0
    %299 = vmatpush1.msra.mxu0 0.0
    %300 = vmatprep.subr.mxu0 0.0
    %301 = vmatpush1.msra.mxu0 0.0
    %302 = vmatprep.mubr.f32.mxu0 0.0
    %303 = vmatmul.mubr.f32.gmra.mrb[0].mxu0 %v220
    %v304 = vpop.f32.mrb[0].mxu0
    %v305 = vadd.f32 0.0, %v304
    %v306 = vpop.f32.mrb[0].mxu0
    %307 = vmatprep.mubr.f32.mxu0 0.0
    %308 = vmatmul.mubr.f32.gmra.mrb[0].mxu0 %v221
    %v309 = vpop.f32.mrb[0].mxu0
    %v310 = vadd.f32 0.0, %v309
    %v311 = vpop.f32.mrb[0].mxu0
    %312 = vdwg.mxu0
    %313 = vst [vmem:[#allocation8] sm:$0xff] %v305
    %314 = vst [vmem:[#allocation8 + $0x8] sm:$0xff] %v310
    %v315 = vsub.f32 %v63, %v305
    %v316 = vsub.f32 %v64, %v310
    %v317 = vmul.f32 %v315, %v315
    %v318 = vmul.f32 %v316, %v316
    %319 = vadd.xlane.f32.xlu0 %v317
    %v320 = vpop.xlane.xlu0 %319
    %321 = vadd.xlane.f32.xlu0 %v318
    %v322 = vpop.xlane.xlu0 %321
    %vm323 = vcmask 7168
    %324 = vst.msk [vmem:[%s5] sm:$0xff] %vm323, %v320
    %325 = vst.msk [vmem:[%s5 + $0x8] sm:$0xff] %vm323, %v322
    %v326 = vadd.f32 %v220, %v221
    %327 = vst [vmem:[#allocation9] sm:$0xff] %v326
    // Predicated region
    $region30: #{tpu_custom_call.1} parent=1 // pred_check
      _
    $region31: #{tpu_custom_call.1} parent=1 // pred_check_branch
      %329 = sbr.rel (0) target = $region33
    $region32: #{tpu_custom_call.1} parent=1 // pred_region
      %s331 = ssub.s32 256, 256
      %332 = vsyncadd [#allocation4], %s331
      %s333 = sshll.u32 [#allocation8], 4
      %s334 = int_to_ptr.vmem [resolvable:$true] %s333
      %339 = dma.vmem_to_hbm [thread:$0]  %s334, 256, %s4, [#allocation4], 128, 128, 8
    $region33: #{tpu_custom_call.1} parent=1 // pred_fallthru
      _
    // Predicated region
    $region34: #{tpu_custom_call.1} parent=1 // pred_check
      _
    $region35: #{tpu_custom_call.1} parent=1 // pred_check_branch
      %341 = sbr.rel (0) target = $region37
    $region36: #{tpu_custom_call.1} parent=1 // pred_region
      _
    $region37: #{tpu_custom_call.1} parent=1 // pred_fallthru
      _
    // Predicated region
    $region38: #{tpu_custom_call.1} parent=1 // pred_check
      _
    $region39: #{tpu_custom_call.1} parent=1 // pred_check_branch
      %343 = sbr.rel (0) target = $region41
    $region40: #{tpu_custom_call.1} parent=1 // pred_region
      %s345 = ssub.s32 128, 128
      %346 = vsyncadd [#allocation10], %s345
      %s348 = sshll.u32 [#allocation9], 4
      %s349 = int_to_ptr.vmem [resolvable:$true] %s348
      %351 = dma.vmem_to_hbm [thread:$0]  %s349, 128, %s6, [#allocation10]
    $region41: #{tpu_custom_call.1} parent=1 // pred_fallthru
      _
    // Predicated region
    $region42: #{tpu_custom_call.1} parent=1 // pred_check
      _
    $region43: #{tpu_custom_call.1} parent=1 // pred_check_branch
      %353 = sbr.rel (0) target = $region45
    $region44: #{tpu_custom_call.1} parent=1 // pred_region
      %354 = dma.done [#allocation4], 256
    $region45: #{tpu_custom_call.1} parent=1 // pred_fallthru
      _
    // Predicated region
    $region46: #{tpu_custom_call.1} parent=1 // pred_check
      _
    $region47: #{tpu_custom_call.1} parent=1 // pred_check_branch
      %356 = sbr.rel (0) target = $region49
    $region48: #{tpu_custom_call.1} parent=1 // pred_region
      _
    $region49: #{tpu_custom_call.1} parent=1 // pred_fallthru
      _
    // Predicated region
    $region50: #{tpu_custom_call.1} parent=1 // pred_check
      _
    $region51: #{tpu_custom_call.1} parent=1 // pred_check_branch
      %358 = sbr.rel (0) target = $region53
    $region52: #{tpu_custom_call.1} parent=1 // pred_region
      %359 = dma.done [#allocation10], 128
    $region53: #{tpu_custom_call.1} parent=1 // pred_fallthru
      _
    %360 = vsyncpa [#allocation3], 1
    %361 = vsyncpa [#allocation6], 1
    %362 = vsyncpa [#allocation4], 1
    %363 = vsyncpa [#allocation10], 1

</llo_original>
